<compile_context>
chip_gen: v5e
topology: v5e:2x2
jax: 0.10.0
libtpu: 0.0.40
codegen_flags: <defaults>
</compile_context>

<pallas_src>
import jax
import jax.numpy as jnp
from jax.experimental import pallas as pl
from jax.experimental.pallas import tpu as pltpu

BN_EPS = 1e-5
OUT_FEATURES = 2
OUT_PAD = 8  # final out-features padded to one sublane group


def _round_up(n, m):
    return ((n + m - 1) // m) * m


def _bn_relu(h, gamma, beta, inv_b):
    # Single-pass batch statistics (f32 accumulation): var = E[h^2] - mu^2,
    # gamma folded into the rsqrt scale so h is touched only once more.
    # TODO(synk): switch to a shifted two-pass variance if cancellation ever
    # becomes an issue at large activation magnitudes.
    s = jnp.sum(h, axis=0, keepdims=True)
    sq = jnp.sum(h * h, axis=0, keepdims=True)
    mu = s * inv_b
    var = sq * inv_b - mu * mu
    scale = gamma * jax.lax.rsqrt(var + BN_EPS)
    shift = beta - mu * scale
    return jnp.maximum(h * scale + shift, 0.0)


def generator_kernel(y_ref, z_ref, w1cat_ref, w2_ref, w3t_ref, pslab_ref, o_ref):
    B = z_ref.shape[0]
    z_dim = z_ref.shape[1]
    label_pad = w1cat_ref.shape[0] - z_dim
    g0 = w1cat_ref.shape[1]
    g1 = w2_ref.shape[1]
    inv_b = 1.0 / B  # whole batch resident (BatchNorm needs whole-batch stats)

    # Fused "embedding gather + concat + first Linear", single matmul:
    #   x @ W1 = concat([z, one_hot(y)]) @ concat([W1_z, embed_table @ W1_e])
    y = y_ref[...]  # (B, 1) int32
    onehot = (y == jax.lax.broadcasted_iota(jnp.int32, (B, label_pad), 1)
              ).astype(z_ref.dtype)
    xcat = jnp.concatenate([z_ref[...], onehot], axis=-1)   # (B, z_dim+label_pad)
    h = jnp.dot(xcat, w1cat_ref[...], preferred_element_type=jnp.float32)
    h = _bn_relu(h, pslab_ref[0:1, :g0], pslab_ref[1:2, :g0], inv_b)

    # Block 2: Linear (no bias) -> BN -> ReLU
    h = jnp.dot(h, w2_ref[...], preferred_element_type=jnp.float32)
    h = _bn_relu(h, pslab_ref[2:3, :g1], pslab_ref[3:4, :g1], inv_b)

    # Final Linear computed transposed: (OUT_PAD, g1) x (B, g1)^T -> (OUT_PAD, B),
    # so the output slab is lane-dense along the batch axis.
    out_t = jax.lax.dot_general(
        w3t_ref[...], h,
        dimension_numbers=(((1,), (1,)), ((), ())),
        preferred_element_type=jnp.float32)                 # (OUT_PAD, B)
    b3col = pslab_ref[OUT_PAD:2 * OUT_PAD, 0:1]              # (OUT_PAD, 1)
    o_ref[...] = jnp.tanh(out_t + b3col).astype(o_ref.dtype)


def prepare_params(params, z_dim):
    """One-time transform of PyTorch-layout params into kernel-ready params."""
    w1 = params["w1"]                                   # [z_dim + emb, g0]
    g0 = w1.shape[1]
    g1 = params["w2"].shape[1]
    label = params["embed_table"].shape[0]
    label_pad = _round_up(label, 8)

    # Fused layer-1 weight: rows [0, z_dim) act on z, rows [z_dim, ...) act on
    # one_hot(y) (embedding folded into the weight).
    w1z = w1[:z_dim, :]
    emb1 = params["embed_table"] @ w1[z_dim:, :]        # [label, g0]
    emb1 = jnp.pad(emb1, ((0, label_pad - label), (0, 0)))
    w1cat = jnp.concatenate([w1z, emb1], axis=0)        # [z_dim + label_pad, g0]

    # Final-layer weight, transposed and sublane-padded: (OUT_PAD, g1).
    w3t = jnp.pad(params["w3"].T, ((0, OUT_PAD - params["w3"].shape[1]), (0, 0)))

    # Small-parameter slab: rows 0..3 = g1, b1, g2, b2; rows 8..15 column 0 = b3.
    dmax = max(g0, g1)
    pslab = jnp.zeros((2 * OUT_PAD, dmax), jnp.float32)
    pslab = pslab.at[0, :g0].set(params["g1"].reshape(-1))
    pslab = pslab.at[1, :g0].set(params["b1"].reshape(-1))
    pslab = pslab.at[2, :g1].set(params["g2"].reshape(-1))
    pslab = pslab.at[3, :g1].set(params["b2"].reshape(-1))
    pslab = pslab.at[OUT_PAD:OUT_PAD + OUT_FEATURES, 0].set(params["b3"].reshape(-1))

    return {"w1cat": w1cat, "w2": params["w2"], "w3t": w3t, "pslab": pslab}


@jax.jit
def generator_forward(z, y, kparams):
    """z: f32[B, z_dim], y: int[B] labels. Returns f32[B, 2]."""
    B = z.shape[0]
    y2 = y.astype(jnp.int32).reshape(B, 1)
    vmem = pl.BlockSpec(memory_space=pltpu.MemorySpace.VMEM)

    # Whole batch is VMEM-resident (BatchNorm couples the batch); size the
    # scoped VMEM window from B so larger batches still compile.
    params_bytes = sum(int(v.size) * v.dtype.itemsize for v in kparams.values())
    vmem_bytes = params_bytes + B * 4096 + (2 << 20)
    vmem_bytes = int(min(max(vmem_bytes, 16 << 20), 96 << 20))

    out_t = pl.pallas_call(
        generator_kernel,
        out_shape=jax.ShapeDtypeStruct((OUT_PAD, B), z.dtype),
        in_specs=[vmem] * 6,
        out_specs=vmem,
        compiler_params=pltpu.CompilerParams(vmem_limit_bytes=vmem_bytes),
    )(y2, z, kparams["w1cat"], kparams["w2"], kparams["w3t"], kparams["pslab"])
    return out_t[:OUT_FEATURES, :].T


def init_params(key, z_dim, gendim, embedding, label):
    ks = jax.random.split(key, 4)
    d0 = z_dim + embedding
    return {
        "embed_table": jax.random.normal(ks[0], (label, embedding), jnp.float32),
        # Linear weights stored as [in, out]
        "w1": jax.random.normal(ks[1], (d0, gendim[0]), jnp.float32) * 0.1,
        "g1": jnp.ones((1, gendim[0]), jnp.float32),   # BN gamma
        "b1": jnp.zeros((1, gendim[0]), jnp.float32),  # BN beta
        "w2": jax.random.normal(ks[2], (gendim[0], gendim[1]), jnp.float32) * 0.1,
        "g2": jnp.ones((1, gendim[1]), jnp.float32),
        "b2": jnp.zeros((1, gendim[1]), jnp.float32),
        "w3": jax.random.normal(ks[3], (gendim[1], OUT_FEATURES), jnp.float32) * 0.1,
        "b3": jnp.zeros((1, OUT_FEATURES), jnp.float32),
    }


def reference_forward(z, y, params):
    """Pure-JAX reference of the original (un-fused) forward."""
    x = jnp.concatenate([z, params["embed_table"][y].astype(z.dtype)], axis=1)
    h = x @ params["w1"]
    mu, var = jnp.mean(h, 0, keepdims=True), jnp.var(h, 0, keepdims=True)
    h = jnp.maximum((h - mu) / jnp.sqrt(var + BN_EPS) * params["g1"] + params["b1"], 0)
    h = h @ params["w2"]
    mu, var = jnp.mean(h, 0, keepdims=True), jnp.var(h, 0, keepdims=True)
    h = jnp.maximum((h - mu) / jnp.sqrt(var + BN_EPS) * params["g2"] + params["b2"], 0)
    return jnp.tanh(h @ params["w3"] + params["b3"])


if __name__ == "__main__":
    # Small shapes consistent with the module: batch=8, z_dim=16, embedding=16,
    # label=10, gendim=(32, 32) -> output (8, 2).
    B, Z_DIM, EMB, LABEL = 8, 16, 16, 10
    GENDIM = (32, 32)

    key = jax.random.PRNGKey(0)
    kz, ky, kp = jax.random.split(key, 3)
    z = jax.random.normal(kz, (B, Z_DIM), jnp.float32)
    y = jax.random.randint(ky, (B,), 0, LABEL, jnp.int32)

    raw_params = init_params(kp, Z_DIM, GENDIM, EMB, LABEL)
    kparams = prepare_params(raw_params, Z_DIM)

    out = generator_forward(z, y, kparams)
    jax.block_until_ready(out)

    ref = reference_forward(z, y, raw_params)
    assert out.shape == (B, OUT_FEATURES), out.shape
    assert jnp.allclose(out, ref, atol=1e-4, rtol=1e-4), float(jnp.max(jnp.abs(out - ref)))

    print("KERNEL_OK")
</pallas_src>

<mosaic_0001>
module attributes {stable_mosaic.version = 11 : i64} {
  func.func @generator_kernel(%arg0: memref<8x1xi32, #tpu.memory_space<vmem>>, %arg1: memref<8x16xf32, #tpu.memory_space<vmem>>, %arg2: memref<32x32xf32, #tpu.memory_space<vmem>>, %arg3: memref<32x32xf32, #tpu.memory_space<vmem>>, %arg4: memref<8x32xf32, #tpu.memory_space<vmem>>, %arg5: memref<16x32xf32, #tpu.memory_space<vmem>>, %arg6: memref<8x8xf32, #tpu.memory_space<vmem>>) attributes {dimension_semantics = [], scalar_prefetch = 0 : i64, scratch_operands = 0 : i64, tpu.core_type = #tpu.core_type<tc>} {
    %c0 = arith.constant 0 : index
    %c0_0 = arith.constant 0 : index
    %0 = vector.load %arg0[%c0, %c0_0] : memref<8x1xi32, #tpu.memory_space<vmem>>, vector<8x1xi32>
    %1 = tpu.iota {dimensions = array<i32: 1>} : vector<8x16xi32>
    %2 = vector.broadcast %0 : vector<8x1xi32> to vector<8x16xi32>
    %3 = arith.cmpi eq, %2, %1 : vector<8x16xi32>
    %4 = arith.extui %3 : vector<8x16xi1> to vector<8x16xi32>
    %5 = arith.sitofp %4 : vector<8x16xi32> to vector<8x16xf32>
    %c0_1 = arith.constant 0 : index
    %c0_2 = arith.constant 0 : index
    %6 = vector.load %arg1[%c0_1, %c0_2] : memref<8x16xf32, #tpu.memory_space<vmem>>, vector<8x16xf32>
    %7 = tpu.concatenate %6, %5 in 1 : vector<8x16xf32>, vector<8x16xf32> -> vector<8x32xf32>
    %c0_3 = arith.constant 0 : index
    %c0_4 = arith.constant 0 : index
    %8 = vector.load %arg2[%c0_3, %c0_4] : memref<32x32xf32, #tpu.memory_space<vmem>>, vector<32x32xf32>
    %cst = arith.constant dense<0.000000e+00> : vector<8x32xf32>
    %9 = tpu.matmul %7, %8, %cst {dimension_numbers = #tpu.dot_dimension_numbers<[1], [0], [0], [1], [0, 0, 1, 1], [], []>} : vector<8x32xf32>, vector<32x32xf32>, vector<8x32xf32> -> vector<8x32xf32>
    %c0_5 = arith.constant 0 : index
    %c0_6 = arith.constant 0 : index
    %10 = vector.load %arg5[%c0_5, %c0_6] : memref<16x32xf32, #tpu.memory_space<vmem>>, vector<1x32xf32>
    %c1 = arith.constant 1 : index
    %c0_7 = arith.constant 0 : index
    %11 = vector.load %arg5[%c1, %c0_7] : memref<16x32xf32, #tpu.memory_space<vmem>>, vector<1x32xf32>
    %cst_8 = arith.constant dense<0.000000e+00> : vector<32xf32>
    %12 = vector.multi_reduction <add>, %9, %cst_8 [0] : vector<8x32xf32> to vector<32xf32>
    %13 = vector.shape_cast %12 : vector<32xf32> to vector<1x32xf32>
    %14 = arith.mulf %9, %9 : vector<8x32xf32>
    %cst_9 = arith.constant dense<0.000000e+00> : vector<32xf32>
    %15 = vector.multi_reduction <add>, %14, %cst_9 [0] : vector<8x32xf32> to vector<32xf32>
    %16 = vector.shape_cast %15 : vector<32xf32> to vector<1x32xf32>
    %cst_10 = arith.constant 1.250000e-01 : f32
    %17 = vector.broadcast %cst_10 : f32 to vector<1x32xf32>
    %18 = arith.mulf %13, %17 : vector<1x32xf32>
    %cst_11 = arith.constant 1.250000e-01 : f32
    %19 = vector.broadcast %cst_11 : f32 to vector<1x32xf32>
    %20 = arith.mulf %16, %19 : vector<1x32xf32>
    %21 = arith.mulf %18, %18 : vector<1x32xf32>
    %22 = arith.subf %20, %21 : vector<1x32xf32>
    %cst_12 = arith.constant 9.99999974E-6 : f32
    %23 = vector.broadcast %cst_12 : f32 to vector<1x32xf32>
    %24 = arith.addf %22, %23 : vector<1x32xf32>
    %25 = math.rsqrt %24 : vector<1x32xf32>
    %26 = arith.mulf %10, %25 : vector<1x32xf32>
    %27 = arith.mulf %18, %26 : vector<1x32xf32>
    %28 = arith.subf %11, %27 : vector<1x32xf32>
    %29 = vector.broadcast %26 : vector<1x32xf32> to vector<8x32xf32>
    %30 = arith.mulf %9, %29 : vector<8x32xf32>
    %31 = vector.broadcast %28 : vector<1x32xf32> to vector<8x32xf32>
    %32 = arith.addf %30, %31 : vector<8x32xf32>
    %cst_13 = arith.constant 0.000000e+00 : f32
    %33 = vector.broadcast %cst_13 : f32 to vector<8x32xf32>
    %34 = arith.maximumf %32, %33 : vector<8x32xf32>
    %c0_14 = arith.constant 0 : index
    %c0_15 = arith.constant 0 : index
    %35 = vector.load %arg3[%c0_14, %c0_15] : memref<32x32xf32, #tpu.memory_space<vmem>>, vector<32x32xf32>
    %cst_16 = arith.constant dense<0.000000e+00> : vector<8x32xf32>
    %36 = tpu.matmul %34, %35, %cst_16 {dimension_numbers = #tpu.dot_dimension_numbers<[1], [0], [0], [1], [0, 0, 1, 1], [], []>} : vector<8x32xf32>, vector<32x32xf32>, vector<8x32xf32> -> vector<8x32xf32>
    %c2 = arith.constant 2 : index
    %c0_17 = arith.constant 0 : index
    %37 = vector.load %arg5[%c2, %c0_17] : memref<16x32xf32, #tpu.memory_space<vmem>>, vector<1x32xf32>
    %c3 = arith.constant 3 : index
    %c0_18 = arith.constant 0 : index
    %38 = vector.load %arg5[%c3, %c0_18] : memref<16x32xf32, #tpu.memory_space<vmem>>, vector<1x32xf32>
    %cst_19 = arith.constant dense<0.000000e+00> : vector<32xf32>
    %39 = vector.multi_reduction <add>, %36, %cst_19 [0] : vector<8x32xf32> to vector<32xf32>
    %40 = vector.shape_cast %39 : vector<32xf32> to vector<1x32xf32>
    %41 = arith.mulf %36, %36 : vector<8x32xf32>
    %cst_20 = arith.constant dense<0.000000e+00> : vector<32xf32>
    %42 = vector.multi_reduction <add>, %41, %cst_20 [0] : vector<8x32xf32> to vector<32xf32>
    %43 = vector.shape_cast %42 : vector<32xf32> to vector<1x32xf32>
    %cst_21 = arith.constant 1.250000e-01 : f32
    %44 = vector.broadcast %cst_21 : f32 to vector<1x32xf32>
    %45 = arith.mulf %40, %44 : vector<1x32xf32>
    %cst_22 = arith.constant 1.250000e-01 : f32
    %46 = vector.broadcast %cst_22 : f32 to vector<1x32xf32>
    %47 = arith.mulf %43, %46 : vector<1x32xf32>
    %48 = arith.mulf %45, %45 : vector<1x32xf32>
    %49 = arith.subf %47, %48 : vector<1x32xf32>
    %cst_23 = arith.constant 9.99999974E-6 : f32
    %50 = vector.broadcast %cst_23 : f32 to vector<1x32xf32>
    %51 = arith.addf %49, %50 : vector<1x32xf32>
    %52 = math.rsqrt %51 : vector<1x32xf32>
    %53 = arith.mulf %37, %52 : vector<1x32xf32>
    %54 = arith.mulf %45, %53 : vector<1x32xf32>
    %55 = arith.subf %38, %54 : vector<1x32xf32>
    %56 = vector.broadcast %53 : vector<1x32xf32> to vector<8x32xf32>
    %57 = arith.mulf %36, %56 : vector<8x32xf32>
    %58 = vector.broadcast %55 : vector<1x32xf32> to vector<8x32xf32>
    %59 = arith.addf %57, %58 : vector<8x32xf32>
    %cst_24 = arith.constant 0.000000e+00 : f32
    %60 = vector.broadcast %cst_24 : f32 to vector<8x32xf32>
    %61 = arith.maximumf %59, %60 : vector<8x32xf32>
    %c0_25 = arith.constant 0 : index
    %c0_26 = arith.constant 0 : index
    %62 = vector.load %arg4[%c0_25, %c0_26] : memref<8x32xf32, #tpu.memory_space<vmem>>, vector<8x32xf32>
    %cst_27 = arith.constant dense<0.000000e+00> : vector<8x8xf32>
    %63 = tpu.matmul %62, %61, %cst_27 {dimension_numbers = #tpu.dot_dimension_numbers<[1], [1], [0], [0], [0, 0, 1, 0], [], []>} : vector<8x32xf32>, vector<8x32xf32>, vector<8x8xf32> -> vector<8x8xf32>
    %c8 = arith.constant 8 : index
    %c0_28 = arith.constant 0 : index
    %64 = vector.load %arg5[%c8, %c0_28] : memref<16x32xf32, #tpu.memory_space<vmem>>, vector<8x1xf32>
    %65 = vector.broadcast %64 : vector<8x1xf32> to vector<8x8xf32>
    %66 = arith.addf %63, %65 : vector<8x8xf32>
    %67 = math.tanh %66 : vector<8x8xf32>
    %c0_29 = arith.constant 0 : index
    %c0_30 = arith.constant 0 : index
    %68 = vector.load %arg6[%c0_29, %c0_30] : memref<8x8xf32, #tpu.memory_space<vmem>>, vector<8x8xf32>
    tpu.vector_store %arg6[%c0_29, %c0_30], %67 {strides = array<i32>} : memref<8x8xf32, #tpu.memory_space<vmem>>, vector<8x8xf32>,
    return
  }
}

</mosaic_0001>

<llo_original>
// kernel: generator_forward.1
$region0: #{generator_forward.1}
  #allocation0 [shape = 'u32[]', space=smem, size = 0x4, offset = 0x4, fixed_abs, tag = 'smem constant byte address 0x4 - core index']
  #allocation1 [shape = 'u32[72,128]{1,0:T(1,128)}', space=vmem, size = 0x9000, scoped, tag = 'internal scratch']
  %s0 = inlined_call_operand.vmem [shape: s32[8,1], index: 0, kind: input, shape index: {}]
  %s1 = inlined_call_operand.vmem [shape: f32[8,16], index: 1, kind: input, shape index: {}]
  %s2 = inlined_call_operand.hbm [shape: f32[32,32], index: 2, kind: input, shape index: {}]
  %s3 = inlined_call_operand.hbm [shape: f32[32,32], index: 3, kind: input, shape index: {}]
  %s4 = inlined_call_operand.hbm [shape: f32[8,32], index: 4, kind: input, shape index: {}]
  %s5 = inlined_call_operand.hbm [shape: f32[16,32], index: 5, kind: input, shape index: {}]
  %s6 = inlined_call_operand.vmem [shape: f32[8,8], index: 6, kind: output, shape index: {}]
  %s7 = sld [smem:[#allocation0]]
  $region50: #{generator_forward.1} parent=0
    _
  %s9 = ssub.s32 1, %s7
  %s10 = scalar_select 0, %s9, %s7
  $region1: #{generator_forward.1} parent=0
    #allocation2 [shape = 'u8[16384]{0}', space=vmem, size = 0x4000, scoped, tag = 'input window, operand 2, single buffered']
    #allocation3 [shape = 's32[1]{0}', space=sflag, size = 0x4, scoped, tag = 'scoped memory for generator_forward.1']
    #allocation4 [shape = 'u8[16384]{0}', space=vmem, size = 0x4000, scoped, tag = 'input window, operand 3, single buffered']
    #allocation5 [shape = 's32[1]{0}', space=sflag, size = 0x4, scoped, tag = 'scoped memory for generator_forward.1']
    #allocation6 [shape = 'u8[4096]{0}', space=vmem, size = 0x1000, scoped, tag = 'input window, operand 4, single buffered']
    #allocation7 [shape = 'u8[8192]{0}', space=vmem, size = 0x2000, scoped, tag = 'input window, operand 5, single buffered']
    #allocation8 [shape = 's32[1]{0}', space=sflag, size = 0x4, scoped, tag = 'scoped memory for generator_forward.1']
    %11 = vsyncpa [#allocation3], 0
    %12 = vsyncpa [#allocation5], 0
    %13 = vsyncpa [#allocation8], 0
    // Predicated region
    $region2: #{generator_forward.1} parent=1 // pred_check
      _
    $region3: #{generator_forward.1} parent=1 // pred_check_branch
      %15 = sbr.rel (0) target = $region5
    $region4: #{generator_forward.1} parent=1 // pred_region
      _
    $region5: #{generator_forward.1} parent=1 // pred_fallthru
      _
    // Predicated region
    $region6: #{generator_forward.1} parent=1 // pred_check
      _
    $region7: #{generator_forward.1} parent=1 // pred_check_branch
      %17 = sbr.rel (0) target = $region9
    $region8: #{generator_forward.1} parent=1 // pred_region
      _
    $region9: #{generator_forward.1} parent=1 // pred_fallthru
      _
    // Predicated region
    $region10: #{generator_forward.1} parent=1 // pred_check
      _
    $region11: #{generator_forward.1} parent=1 // pred_check_branch
      %19 = sbr.rel (0) target = $region13
    $region12: #{generator_forward.1} parent=1 // pred_region
      %21 = vsyncadd [#allocation3], 0
      %s22 = sshll.u32 %s2, 4
      %s23 = int_to_ptr.hbm [resolvable:$true] %s22
      %s24 = sshll.u32 [#allocation2], 4
      %s25 = int_to_ptr.vmem [resolvable:$true] %s24
      %30 = dma.hbm_to_vmem [thread:$0]  %s23, 512, %s25, [#allocation3], 128, 128, 8
    $region13: #{generator_forward.1} parent=1 // pred_fallthru
      _
    // Predicated region
    $region14: #{generator_forward.1} parent=1 // pred_check
      _
    $region15: #{generator_forward.1} parent=1 // pred_check_branch
      %32 = sbr.rel (0) target = $region17
    $region16: #{generator_forward.1} parent=1 // pred_region
      %34 = vsyncadd [#allocation5], 0
      %s35 = sshll.u32 %s3, 4
      %s36 = int_to_ptr.hbm [resolvable:$true] %s35
      %s37 = sshll.u32 [#allocation4], 4
      %s38 = int_to_ptr.vmem [resolvable:$true] %s37
      %43 = dma.hbm_to_vmem [thread:$0]  %s36, 512, %s38, [#allocation5], 128, 128, 8
    $region17: #{generator_forward.1} parent=1 // pred_fallthru
      _
    // Predicated region
    $region18: #{generator_forward.1} parent=1 // pred_check
      _
    $region19: #{generator_forward.1} parent=1 // pred_check_branch
      %45 = sbr.rel (0) target = $region21
    $region20: #{generator_forward.1} parent=1 // pred_region
      %47 = vsyncadd [#allocation5], 0
      %s49 = sshll.u32 %s4, 4
      %s50 = int_to_ptr.hbm [resolvable:$true] %s49
      %s51 = sshll.u32 [#allocation6], 4
      %s52 = int_to_ptr.vmem [resolvable:$true] %s51
      %54 = dma.hbm_to_vmem [thread:$0]  %s50, 128, %s52, [#allocation5]
    $region21: #{generator_forward.1} parent=1 // pred_fallthru
      _
    // Predicated region
    $region22: #{generator_forward.1} parent=1 // pred_check
      _
    $region23: #{generator_forward.1} parent=1 // pred_check_branch
      %56 = sbr.rel (0) target = $region25
    $region24: #{generator_forward.1} parent=1 // pred_region
      %58 = vsyncadd [#allocation8], 0
      %s59 = sshll.u32 %s5, 4
      %s60 = int_to_ptr.hbm [resolvable:$true] %s59
      %s61 = sshll.u32 [#allocation7], 4
      %s62 = int_to_ptr.vmem [resolvable:$true] %s61
      %67 = dma.hbm_to_vmem [thread:$0]  %s60, 256, %s62, [#allocation8], 128, 128, 8
    $region25: #{generator_forward.1} parent=1 // pred_fallthru
      _
    // Predicated region
    $region26: #{generator_forward.1} parent=1 // pred_check
      _
    $region27: #{generator_forward.1} parent=1 // pred_check_branch
      %69 = sbr.rel (0) target = $region29
    $region28: #{generator_forward.1} parent=1 // pred_region
      %71 = dma.done [#allocation3], 512
    $region29: #{generator_forward.1} parent=1 // pred_fallthru
      _
    // Predicated region
    $region30: #{generator_forward.1} parent=1 // pred_check
      _
    $region31: #{generator_forward.1} parent=1 // pred_check_branch
      %73 = sbr.rel (0) target = $region33
    $region32: #{generator_forward.1} parent=1 // pred_region
      %75 = dma.done [#allocation5], 512
    $region33: #{generator_forward.1} parent=1 // pred_fallthru
      _
    // Predicated region
    $region34: #{generator_forward.1} parent=1 // pred_check
      _
    $region35: #{generator_forward.1} parent=1 // pred_check_branch
      %77 = sbr.rel (0) target = $region37
    $region36: #{generator_forward.1} parent=1 // pred_region
      %79 = dma.done [#allocation5], 128
    $region37: #{generator_forward.1} parent=1 // pred_fallthru
      _
    // Predicated region
    $region38: #{generator_forward.1} parent=1 // pred_check
      _
    $region39: #{generator_forward.1} parent=1 // pred_check_branch
      %81 = sbr.rel (0) target = $region41
    $region40: #{generator_forward.1} parent=1 // pred_region
      %83 = dma.done [#allocation8], 256
    $region41: #{generator_forward.1} parent=1 // pred_fallthru
      _
    %v84 = vld [vmem:[%s0] sm:$0xff]
    %v85 = vlaneseq
    %v86 = vand.u32 %v85, 127
    %87 = vset.pattern.permute.xlu0 0
    %88 = vperm.xlu0 %87, %v84
    %v89 = vpop.permute.xlu0 %88
    %vm90 = vcmp.eq.s32.totalorder %v89, %v86
    %v91 = vsel %vm90, 1, 0
    %v92 = vcvt.s32.f32 %v91
    %v93 = vld [vmem:[%s1] sm:$0xff]
    %95 = vrot.lane.b32.xlu0 %v92, 16
    %v96 = vpop.permute.xlu0 %95
    %vm98 = vcmask 130048
    %v99 = vsel %vm98, %v93, %v96
    %v100 = vld [vmem:[#allocation2] sm:$0xff]
    %v101 = vld [vmem:[#allocation2 + $0x8] sm:$0xff]
    %v102 = vld [vmem:[#allocation2 + $0x10] sm:$0xff]
    %v103 = vld [vmem:[#allocation2 + $0x18] sm:$0xff]
    %vm104 = vcmask 261120
    %v106 = vsel %vm104, %v99, 0
    %108 = vmatpush.msra.mxu0 0.0
    %109 = vmatpush.msra.mxu0 0.0
    %110 = vmatpush.msra.mxu0 0.0
    %111 = vmatpush.msra.mxu0 0.0
    %112 = vmatpush.msra.mxu0 0.0
    %113 = vmatpush.msra.mxu0 0.0
    %114 = vmatpush.msra.mxu0 0.0
    %115 = vmatpush.msra.mxu0 0.0
    %116 = vmatpush.msra.mxu0 0.0
    %117 = vmatpush.msra.mxu0 0.0
    %118 = vmatpush.msra.mxu0 0.0
    %119 = vmatpush.msra.mxu0 0.0
    %120 = vmatpush.msra.mxu0 %v103
    %121 = vmatpush.msra.mxu0 %v102
    %122 = vmatpush.msra.mxu0 %v101
    %123 = vmatpush.msra.mxu0 %v100
    %124 = vmatmul.f32.gmra.mxu0 %v106
    %v125 = vpop.f32.mrf.mxu0
    %v126 = vadd.f32 0.0, %v125
    %127 = vdwg.mxu0
    %v128 = vld [vmem:[#allocation7] sm:$0x1]
    %v129 = vld [vmem:[#allocation7 + $0x1] sm:$0x1]
    %v130 = vsel %vm104, %v126, 0.0
    %v131 = vrot.slane %v130, 4
    %v132 = vadd.f32 %v130, %v131
    %v133 = vrot.slane %v132, 2
    %v134 = vadd.f32 %v132, %v133
    %v135 = vrot.slane %v134, 1
    %v136 = vadd.f32 %v134, %v135
    %v137 = vmul.f32 %v126, %v126
    %v138 = vsel %vm104, %v137, 0.0
    %v139 = vrot.slane %v138, 4
    %v140 = vadd.f32 %v138, %v139
    %v141 = vrot.slane %v140, 2
    %v142 = vadd.f32 %v140, %v141
    %v143 = vrot.slane %v142, 1
    %v144 = vadd.f32 %v142, %v143
    %v145 = vmul.f32 %v136, 0.125
    %v146 = vmul.f32 %v144, 0.125
    %v147 = vmul.f32 %v145, %v145
    %v148 = vsub.f32 %v146, %v147
    %v149 = vadd.f32 %v148, 1e-05
    %v150 = vrsqrt.pop %v149
    %v151 = vmul.f32 %v150, %v149
    %v152 = vmul.f32 %v151, %v150
    %v153 = vmul.f32 0.5, %v152
    %v154 = vsub.f32 1.5, %v153
    %v155 = vmul.f32 %v150, %v154
    %vm156 = vweird.f32 %v149
    %vm157 = vweird.f32 %v150
    %vm158 = vmor %vm156, %vm157
    %v159 = vsel %vm158, %v150, %v155
    %v160 = vmul.f32 %v128, %v159
    %v161 = vmul.f32 %v145, %v160
    %v162 = vsub.f32 %v129, %v161
    %v163 = vperm.slane %v160, 0
    %v164 = vmul.f32 %v126, %v163
    %v165 = vperm.slane %v162, 0
    %v166 = vadd.f32 %v164, %v165
    %v167 = vmax.f32 %v166, 0.0
    %v168 = vld [vmem:[#allocation4] sm:$0xff]
    %v169 = vld [vmem:[#allocation4 + $0x8] sm:$0xff]
    %v170 = vld [vmem:[#allocation4 + $0x10] sm:$0xff]
    %v171 = vld [vmem:[#allocation4 + $0x18] sm:$0xff]
    %v173 = vsel %vm104, %v167, 0
    %175 = vmatpush.msra.mxu0 0.0
    %176 = vmatpush.msra.mxu0 0.0
    %177 = vmatpush.msra.mxu0 0.0
    %178 = vmatpush.msra.mxu0 0.0
    %179 = vmatpush.msra.mxu0 0.0
    %180 = vmatpush.msra.mxu0 0.0
    %181 = vmatpush.msra.mxu0 0.0
    %182 = vmatpush.msra.mxu0 0.0
    %183 = vmatpush.msra.mxu0 0.0
    %184 = vmatpush.msra.mxu0 0.0
    %185 = vmatpush.msra.mxu0 0.0
    %186 = vmatpush.msra.mxu0 0.0
    %187 = vmatpush.msra.mxu0 %v171
    %188 = vmatpush.msra.mxu0 %v170
    %189 = vmatpush.msra.mxu0 %v169
    %190 = vmatpush.msra.mxu0 %v168
    %191 = vmatmul.f32.gmra.mxu0 %v173
    %v192 = vpop.f32.mrf.mxu0
    %v193 = vadd.f32 0.0, %v192
    %194 = vdwg.mxu0
    %v195 = vld [vmem:[#allocation7 + $0x2] sm:$0x1]
    %v196 = vld [vmem:[#allocation7 + $0x3] sm:$0x1]
    %v197 = vsel %vm104, %v193, 0.0
    %v198 = vrot.slane %v197, 4
    %v199 = vadd.f32 %v197, %v198
    %v200 = vrot.slane %v199, 2
    %v201 = vadd.f32 %v199, %v200
    %v202 = vrot.slane %v201, 1
    %v203 = vadd.f32 %v201, %v202
    %v204 = vmul.f32 %v193, %v193
    %v205 = vsel %vm104, %v204, 0.0
    %v206 = vrot.slane %v205, 4
    %v207 = vadd.f32 %v205, %v206
    %v208 = vrot.slane %v207, 2
    %v209 = vadd.f32 %v207, %v208
    %v210 = vrot.slane %v209, 1
    %v211 = vadd.f32 %v209, %v210
    %v212 = vmul.f32 %v203, 0.125
    %v213 = vmul.f32 %v211, 0.125
    %v214 = vmul.f32 %v212, %v212
    %v215 = vsub.f32 %v213, %v214
    %v216 = vadd.f32 %v215, 1e-05
    %v217 = vrsqrt.pop %v216
    %v218 = vmul.f32 %v217, %v216
    %v219 = vmul.f32 %v218, %v217
    %v220 = vmul.f32 0.5, %v219
    %v221 = vsub.f32 1.5, %v220
    %v222 = vmul.f32 %v217, %v221
    %vm223 = vweird.f32 %v216
    %vm224 = vweird.f32 %v217
    %vm225 = vmor %vm223, %vm224
    %v226 = vsel %vm225, %v217, %v222
    %v227 = vmul.f32 %v195, %v226
    %v228 = vmul.f32 %v212, %v227
    %v229 = vsub.f32 %v196, %v228
    %v230 = vperm.slane %v227, 0
    %v231 = vmul.f32 %v193, %v230
    %v232 = vperm.slane %v229, 0
    %v233 = vadd.f32 %v231, %v232
    %v234 = vmax.f32 %v233, 0.0
    %v235 = vld [vmem:[#allocation6] sm:$0xff]
    %v236 = vld [vmem:[#allocation7 + $0x8] sm:$0xff]
    %238 = vset.pattern.permute.xlu0 0
    %239 = vperm.xlu0 %238, %v236
    %v240 = vpop.permute.xlu0 %239
    %v243 = vsel %vm104, %v235, 0
    %v246 = vsel %vm104, %v234, 0
    %248 = vmatpush.xpose.msra.mxu0 0.0
    %249 = vmatpush.xpose.msra.mxu0 0.0
    %250 = vmatpush.xpose.msra.mxu0 0.0
    %251 = vmatpush.xpose.msra.mxu0 0.0
    %252 = vmatpush.xpose.msra.mxu0 0.0
    %253 = vmatpush.xpose.msra.mxu0 0.0
    %254 = vmatpush.xpose.msra.mxu0 0.0
    %255 = vmatpush.xpose.msra.mxu0 0.0
    %256 = vmatpush.xpose.msra.mxu0 0.0
    %257 = vmatpush.xpose.msra.mxu0 0.0
    %258 = vmatpush.xpose.msra.mxu0 0.0
    %259 = vmatpush.xpose.msra.mxu0 0.0
    %260 = vmatpush.xpose.msra.mxu0 0.0
    %261 = vmatpush.xpose.msra.mxu0 0.0
    %262 = vmatpush.xpose.msra.mxu0 0.0
    %263 = vmatpush.xpose.msra.mxu0 %v246
    %264 = vmatmul.f32.gmra.mxu0 %v243
    %v265 = vpop.f32.mrf.mxu0
    %v266 = vadd.f32 %v240, %v265
    %267 = vdwg.mxu0
    %v268 = vtanh.pop %v266
    %vm269 = vcmask 64512
    %270 = vst.msk [vmem:[%s6] sm:$0xff] %vm269, %v268
    // Predicated region
    $region42: #{generator_forward.1} parent=1 // pred_check
      _
    $region43: #{generator_forward.1} parent=1 // pred_check_branch
      %272 = sbr.rel (0) target = $region45
    $region44: #{generator_forward.1} parent=1 // pred_region
      _
    $region45: #{generator_forward.1} parent=1 // pred_fallthru
      _
    // Predicated region
    $region46: #{generator_forward.1} parent=1 // pred_check
      _
    $region47: #{generator_forward.1} parent=1 // pred_check_branch
      %274 = sbr.rel (0) target = $region49
    $region48: #{generator_forward.1} parent=1 // pred_region
      _
    $region49: #{generator_forward.1} parent=1 // pred_fallthru
      _
    %275 = vsyncpa [#allocation3], 1
    %276 = vsyncpa [#allocation5], 1
    %277 = vsyncpa [#allocation8], 1

</llo_original>
